<compile_context>
chip_gen: v7x
topology: tpu7x:2x2x1
jax: 0.10.0
libtpu: 0.0.40
codegen_flags: <defaults>
</compile_context>

<pallas_src>
import functools
import math

import numpy as np
import jax
import jax.numpy as jnp
from jax.experimental import pallas as pl
from jax.experimental.pallas import tpu as pltpu


def _as_i32(v):
    """Wrap an unsigned 32-bit constant into a Python int representable as int32."""
    return int(np.uint32(v).astype(np.int32))


_GOLDEN = _as_i32(0x9E3779B9)
_FMIX_C1 = _as_i32(0x85EBCA6B)
_FMIX_C2 = _as_i32(0xC2B2AE35)
_TWO_PI = 2.0 * math.pi
_INV_2_16 = 1.0 / float(1 << 16)


def _fmix32(x):
    """murmur3 finalizer on int32 (wrapping mul, logical shifts) -- pure VPU ops."""
    x = x ^ jax.lax.shift_right_logical(x, 16)
    x = x * _FMIX_C1
    x = x ^ jax.lax.shift_right_logical(x, 13)
    x = x * _FMIX_C2
    x = x ^ jax.lax.shift_right_logical(x, 16)
    return x


def _noise_kernel(seed_ref, x_ref, o_ref, *, strength, min_signal,
                  block_rows, half, half_shift):
    pid = pl.program_id(0)

    # Per-call key derived from the seed (SMEM scalar).
    key = seed_ref[0] * _GOLDEN

    # One globally-unique counter per output PAIR (left-half element + its
    # right-half partner).  base is a scalar (sreg); the in-block index uses a
    # shift (half is a power of two), not a per-element 32-bit multiply.
    base = pid * (block_rows * half)
    row = jax.lax.broadcasted_iota(jnp.int32, (block_rows, half), 0)
    col = jax.lax.broadcasted_iota(jnp.int32, (block_rows, half), 1)
    ctr = base + (row << half_shift) + col

    # Single hash per pair; split 32 bits into two 16-bit uniforms.
    bits = _fmix32(ctr ^ key)
    hi = jax.lax.shift_right_logical(bits, 16)      # [0, 2^16)
    lo = bits & 0xFFFF                              # [0, 2^16)
    u1 = (hi.astype(jnp.float32) + 1.0) * jnp.float32(_INV_2_16)   # (0, 1], avoids log(0)
    u2 = lo.astype(jnp.float32) * jnp.float32(_INV_2_16)           # [0, 1)

    # Box-Muller: both branches reused -> log/sqrt/cos/sin once per 2 outputs.
    # These run on the EUP slot, which has slack on the VALU-bound chips.
    r = jnp.sqrt(-2.0 * jnp.log(u1))
    theta = jnp.float32(_TWO_PI) * u2
    z1 = r * jnp.cos(theta)
    z2 = r * jnp.sin(theta)

    s = jnp.float32(strength)
    m = jnp.float32(min_signal)

    # torch.normal(mean=x, std=strength * x) == x * (1 + strength * z)
    xa = jnp.maximum(x_ref[:, :half], m)
    xb = jnp.maximum(x_ref[:, half:], m)
    o_ref[:, :half] = jnp.clip(xa * (1.0 + s * z1), 0.0, 1.0).astype(o_ref.dtype)
    o_ref[:, half:] = jnp.clip(xb * (1.0 + s * z2), 0.0, 1.0).astype(o_ref.dtype)


def noise_module_forward(cxr, seed, strength=0.3, min_signal=0.01):
    """Pallas implementation of NoiseModule.forward.

    cxr: float32 array, NCHW [B, C, H, W] with values in [0, 1].
    seed: python int / int32 scalar controlling the noise draw.
    """
    orig_shape = cxr.shape
    orig_dtype = cxr.dtype
    n = int(np.prod(orig_shape))

    cols = 1024
    half = cols // 2
    half_shift = int(math.log2(half))
    assert (1 << half_shift) == half

    if n % cols == 0:
        # Fast path (typical CXR shapes): reshape is layout-free, no extra HBM pass.
        rows = n // cols
        x2 = cxr.reshape(rows, cols)
        padded = False
    else:
        # Ragged fallback: one extra pad + tail-slice pass. Atypical for CXR inputs.
        rows = -(-n // cols)
        pad = rows * cols - n
        x2 = jnp.pad(cxr.reshape(-1), (0, pad)).reshape(rows, cols)
        padded = True

    # Block rows: multiple of 8, aim for >= 4 grid steps (megacore sharding on
    # v7x + DMA/compute overlap), capped at 512 rows (2 MiB f32 per operand
    # block) so double-buffered in+out plus elementwise temporaries fit the
    # 32 MiB scoped VMEM budget even on v7x (64 MiB physical).
    max_bm = 512
    if rows <= 8:
        bm = rows
    else:
        bm = min(max_bm, max(8, (rows // 4) // 8 * 8))
    grid = (pl.cdiv(rows, bm),)

    kernel = functools.partial(
        _noise_kernel,
        strength=float(strength),
        min_signal=float(min_signal),
        block_rows=bm,
        half=half,
        half_shift=half_shift,
    )

    cost = pl.CostEstimate(
        flops=25 * n,              # integer hash + Box-Muller arithmetic dominates
        transcendentals=2 * n,     # log/sqrt/cos/sin once per output pair
        bytes_accessed=2 * n * 4,  # one read + one write per element
    )

    out2 = pl.pallas_call(
        kernel,
        out_shape=jax.ShapeDtypeStruct((rows, cols), orig_dtype),
        grid_spec=pltpu.PrefetchScalarGridSpec(
            num_scalar_prefetch=1,
            grid=grid,
            in_specs=[pl.BlockSpec((bm, cols), lambda i, seed_ref: (i, 0))],
            out_specs=pl.BlockSpec((bm, cols), lambda i, seed_ref: (i, 0)),
        ),
        compiler_params=pltpu.CompilerParams(
            dimension_semantics=("parallel",),
            vmem_limit_bytes=32 * 1024 * 1024,
        ),
        cost_estimate=cost,
    )(jnp.asarray([seed], jnp.int32), x2)

    if padded:
        return out2.reshape(-1)[:n].reshape(orig_shape)
    return out2.reshape(orig_shape)


if __name__ == "__main__":
    key = jax.random.PRNGKey(0)

    # Small CXR-like input: batch=2, channels=4, spatial=16x16, values in [0, 1].
    # n = 2048 -> fast path (no pad), single grid step.
    x = jax.random.uniform(key, (2, 4, 16, 16), dtype=jnp.float32)
    out = jax.block_until_ready(noise_module_forward(x, seed=0, strength=0.3, min_signal=0.01))
    assert out.shape == x.shape and out.dtype == x.dtype
    assert bool(jnp.all(jnp.isfinite(out)))
    assert bool(jnp.all(out >= 0.0)) and bool(jnp.all(out <= 1.0))
    # Noise should actually perturb the (clamped) signal.
    assert float(jnp.mean(jnp.abs(out - jnp.clip(x, 0.01, 1.0)))) > 1e-3

    # Exercise a multi-step grid with a partial final block (rows=72, bm=16).
    x2 = jax.random.uniform(jax.random.PRNGKey(1), (1, 1, 72, 1024), dtype=jnp.float32)
    o2 = jax.block_until_ready(noise_module_forward(x2, seed=7))
    assert o2.shape == x2.shape
    assert bool(jnp.all(jnp.isfinite(o2)))
    assert bool(jnp.all(o2 >= 0.0)) and bool(jnp.all(o2 <= 1.0))

    # Exercise the ragged-tail fallback path (n not a multiple of 1024).
    x3 = jax.random.uniform(jax.random.PRNGKey(2), (1, 3, 17, 19), dtype=jnp.float32)
    o3 = jax.block_until_ready(noise_module_forward(x3, seed=13))
    assert o3.shape == x3.shape
    assert bool(jnp.all(jnp.isfinite(o3)))
    assert bool(jnp.all(o3 >= 0.0)) and bool(jnp.all(o3 <= 1.0))

    print("KERNEL_OK")
</pallas_src>

<mosaic_0001>
module attributes {stable_mosaic.version = 11 : i64} {
  func.func @_noise_kernel(%arg0: i32, %arg1: memref<1xi32, #tpu.memory_space<smem>>, %arg2: memref<2x1024xf32, #tpu.memory_space<vmem>>, %arg3: memref<2x1024xf32, #tpu.memory_space<vmem>>) attributes {dimension_semantics = [#tpu.dimension_semantics<parallel>], iteration_bounds = array<i64: 1>, scalar_prefetch = 1 : i64, scratch_operands = 0 : i64, tpu.core_type = #tpu.core_type<tc>, window_params = [{transform_indices = @transform_0, window_bounds = array<i64: 2, 1024>}, {transform_indices = @transform_1, window_bounds = array<i64: 2, 1024>}]} {
    %c0 = arith.constant 0 : index
    %0 = memref.load %arg1[%c0] : memref<1xi32, #tpu.memory_space<smem>>
    %c-1640531527_i32 = arith.constant -1640531527 : i32
    %1 = arith.muli %0, %c-1640531527_i32 : i32
    %c1024_i32 = arith.constant 1024 : i32
    %2 = arith.muli %arg0, %c1024_i32 : i32
    %3 = tpu.iota {dimensions = array<i32: 0>} : vector<2x512xi32>
    %4 = tpu.iota {dimensions = array<i32: 1>} : vector<2x512xi32>
    %c9_i32 = arith.constant 9 : i32
    %5 = vector.broadcast %c9_i32 : i32 to vector<2x512xi32>
    %6 = arith.shli %3, %5 : vector<2x512xi32>
    %7 = vector.broadcast %2 : i32 to vector<2x512xi32>
    %8 = arith.addi %7, %6 : vector<2x512xi32>
    %9 = arith.addi %8, %4 : vector<2x512xi32>
    %10 = vector.broadcast %1 : i32 to vector<2x512xi32>
    %11 = arith.xori %9, %10 : vector<2x512xi32>
    %c16_i32 = arith.constant 16 : i32
    %12 = vector.broadcast %c16_i32 : i32 to vector<2x512xi32>
    %13 = arith.shrui %11, %12 : vector<2x512xi32>
    %14 = arith.xori %11, %13 : vector<2x512xi32>
    %c-2048144789_i32 = arith.constant -2048144789 : i32
    %15 = vector.broadcast %c-2048144789_i32 : i32 to vector<2x512xi32>
    %16 = arith.muli %14, %15 : vector<2x512xi32>
    %c13_i32 = arith.constant 13 : i32
    %17 = vector.broadcast %c13_i32 : i32 to vector<2x512xi32>
    %18 = arith.shrui %16, %17 : vector<2x512xi32>
    %19 = arith.xori %16, %18 : vector<2x512xi32>
    %c-1028477387_i32 = arith.constant -1028477387 : i32
    %20 = vector.broadcast %c-1028477387_i32 : i32 to vector<2x512xi32>
    %21 = arith.muli %19, %20 : vector<2x512xi32>
    %c16_i32_0 = arith.constant 16 : i32
    %22 = vector.broadcast %c16_i32_0 : i32 to vector<2x512xi32>
    %23 = arith.shrui %21, %22 : vector<2x512xi32>
    %24 = arith.xori %21, %23 : vector<2x512xi32>
    %c16_i32_1 = arith.constant 16 : i32
    %25 = vector.broadcast %c16_i32_1 : i32 to vector<2x512xi32>
    %26 = arith.shrui %24, %25 : vector<2x512xi32>
    %c65535_i32 = arith.constant 65535 : i32
    %27 = vector.broadcast %c65535_i32 : i32 to vector<2x512xi32>
    %28 = arith.andi %24, %27 : vector<2x512xi32>
    %29 = arith.sitofp %26 : vector<2x512xi32> to vector<2x512xf32>
    %cst = arith.constant 1.000000e+00 : f32
    %30 = vector.broadcast %cst : f32 to vector<2x512xf32>
    %31 = arith.addf %29, %30 : vector<2x512xf32>
    %cst_2 = arith.constant 1.52587891E-5 : f32
    %32 = vector.broadcast %cst_2 : f32 to vector<2x512xf32>
    %33 = arith.mulf %31, %32 : vector<2x512xf32>
    %34 = arith.sitofp %28 : vector<2x512xi32> to vector<2x512xf32>
    %cst_3 = arith.constant 1.52587891E-5 : f32
    %35 = vector.broadcast %cst_3 : f32 to vector<2x512xf32>
    %36 = arith.mulf %34, %35 : vector<2x512xf32>
    %37 = math.log %33 : vector<2x512xf32>
    %cst_4 = arith.constant -2.000000e+00 : f32
    %38 = vector.broadcast %cst_4 : f32 to vector<2x512xf32>
    %39 = arith.mulf %38, %37 : vector<2x512xf32>
    %40 = math.sqrt %39 : vector<2x512xf32>
    %cst_5 = arith.constant 6.28318548 : f32
    %41 = vector.broadcast %cst_5 : f32 to vector<2x512xf32>
    %42 = arith.mulf %41, %36 : vector<2x512xf32>
    %43 = math.cos %42 : vector<2x512xf32>
    %44 = arith.mulf %40, %43 : vector<2x512xf32>
    %45 = math.sin %42 : vector<2x512xf32>
    %46 = arith.mulf %40, %45 : vector<2x512xf32>
    %c0_6 = arith.constant 0 : index
    %c0_7 = arith.constant 0 : index
    %47 = vector.load %arg2[%c0_6, %c0_7] : memref<2x1024xf32, #tpu.memory_space<vmem>>, vector<2x512xf32>
    %cst_8 = arith.constant 0.00999999977 : f32
    %48 = vector.broadcast %cst_8 : f32 to vector<2x512xf32>
    %49 = arith.maximumf %47, %48 : vector<2x512xf32>
    %c0_9 = arith.constant 0 : index
    %c512 = arith.constant 512 : index
    %50 = vector.load %arg2[%c0_9, %c512] : memref<2x1024xf32, #tpu.memory_space<vmem>>, vector<2x512xf32>
    %cst_10 = arith.constant 0.00999999977 : f32
    %51 = vector.broadcast %cst_10 : f32 to vector<2x512xf32>
    %52 = arith.maximumf %50, %51 : vector<2x512xf32>
    %cst_11 = arith.constant 3.000000e-01 : f32
    %53 = vector.broadcast %cst_11 : f32 to vector<2x512xf32>
    %54 = arith.mulf %53, %44 : vector<2x512xf32>
    %cst_12 = arith.constant 1.000000e+00 : f32
    %55 = vector.broadcast %cst_12 : f32 to vector<2x512xf32>
    %56 = arith.addf %55, %54 : vector<2x512xf32>
    %57 = arith.mulf %49, %56 : vector<2x512xf32>
    %cst_13 = arith.constant 0.000000e+00 : f32
    %cst_14 = arith.constant 1.000000e+00 : f32
    %58 = vector.broadcast %cst_13 : f32 to vector<2x512xf32>
    %59 = arith.maximumf %58, %57 : vector<2x512xf32>
    %60 = vector.broadcast %cst_14 : f32 to vector<2x512xf32>
    %61 = arith.minimumf %60, %59 : vector<2x512xf32>
    %c0_15 = arith.constant 0 : index
    %c0_16 = arith.constant 0 : index
    %62 = vector.load %arg3[%c0_15, %c0_16] : memref<2x1024xf32, #tpu.memory_space<vmem>>, vector<2x512xf32>
    tpu.vector_store %arg3[%c0_15, %c0_16], %61 {strides = array<i32>} : memref<2x1024xf32, #tpu.memory_space<vmem>>, vector<2x512xf32>,
    %cst_17 = arith.constant 3.000000e-01 : f32
    %63 = vector.broadcast %cst_17 : f32 to vector<2x512xf32>
    %64 = arith.mulf %63, %46 : vector<2x512xf32>
    %cst_18 = arith.constant 1.000000e+00 : f32
    %65 = vector.broadcast %cst_18 : f32 to vector<2x512xf32>
    %66 = arith.addf %65, %64 : vector<2x512xf32>
    %67 = arith.mulf %52, %66 : vector<2x512xf32>
    %cst_19 = arith.constant 0.000000e+00 : f32
    %cst_20 = arith.constant 1.000000e+00 : f32
    %68 = vector.broadcast %cst_19 : f32 to vector<2x512xf32>
    %69 = arith.maximumf %68, %67 : vector<2x512xf32>
    %70 = vector.broadcast %cst_20 : f32 to vector<2x512xf32>
    %71 = arith.minimumf %70, %69 : vector<2x512xf32>
    %c0_21 = arith.constant 0 : index
    %c512_22 = arith.constant 512 : index
    %72 = vector.load %arg3[%c0_21, %c512_22] : memref<2x1024xf32, #tpu.memory_space<vmem>>, vector<2x512xf32>
    tpu.vector_store %arg3[%c0_21, %c512_22], %71 {strides = array<i32>} : memref<2x1024xf32, #tpu.memory_space<vmem>>, vector<2x512xf32>,
    return
  }
  func.func @transform_0(%arg0: i32, %arg1: memref<1xi32, #tpu.memory_space<smem>>) -> (i32, i32) {
    %c0_i32 = arith.constant 0 : i32
    %c0_i32_0 = arith.constant 0 : i32
    return %arg0, %c0_i32 : i32, i32
  }
  func.func @transform_1(%arg0: i32, %arg1: memref<1xi32, #tpu.memory_space<smem>>) -> (i32, i32) {
    %c0_i32 = arith.constant 0 : i32
    %c0_i32_0 = arith.constant 0 : i32
    return %arg0, %c0_i32 : i32, i32
  }
}

</mosaic_0001>

<llo_original>
// kernel: tpu_custom_call.1
$region0: #{tpu_custom_call.1}
  #allocation0 [shape = 'u32[]', space=smem, size = 0x4, offset = 0x4, fixed_abs, tag = 'smem constant byte address 0x4 - core index']
  #allocation1 [shape = 'u32[144,128]{1,0:T(1,128)}', space=vmem, size = 0x12000, scoped, tag = 'internal scratch']
  #allocation2 [shape = 's32[1]{0}', space=sflag, size = 0x4, scoped, tag = 'scoped memory for tpu_custom_call.1']
  #allocation3 [shape = 's32[1]{0:T(128)S(6)}', space=smem, size = 0x200, scoped, tag = 'prefetched SMEM operand 0']
  %s0 = inlined_call_operand.<no memory space> [shape: s32[1], index: 0, kind: input, shape index: {}]
  %s1 = inlined_call_operand.hbm [shape: f32[2,1024], index: 1, kind: input, shape index: {}]
  %s2 = inlined_call_operand.hbm [shape: f32[2,1024], index: 2, kind: output, shape index: {}]
  %s3 = sld [smem:[#allocation0]]
  $region18: #{tpu_custom_call.1} parent=0
    _
  %s5 = ssub.s32 1, %s3
  %s6 = scalar_select 0, %s5, %s3
  %7 = sst [smem:[#allocation3]] %s0
  $region1: #{tpu_custom_call.1} parent=0
    #allocation4 [shape = 'u8[8192]{0}', space=vmem, size = 0x2000, scoped, tag = 'input window, operand 1, single buffered']
    #allocation5 [shape = 's32[1]{0}', space=sflag, size = 0x4, scoped, tag = 'scoped memory for tpu_custom_call.1']
    #allocation6 [shape = 's32[1]{0}', space=sflag, size = 0x4, scoped, tag = 'scoped memory for tpu_custom_call.1']
    #allocation7 [shape = 'u8[8192]{0}', space=vmem, size = 0x2000, scoped, tag = 'output window, operand 0, single buffered']
    %8 = vsyncpa [#allocation5], 0
    %9 = vsyncpa [#allocation6], 0
    // Predicated region
    $region2: #{tpu_custom_call.1} parent=1 // pred_check
      _
    $region3: #{tpu_custom_call.1} parent=1 // pred_check_branch
      %11 = sbr.rel (0) target = $region5
    $region4: #{tpu_custom_call.1} parent=1 // pred_region
      %s13 = ssub.s32 256, 256
      %14 = vsyncadd [#allocation5], %s13
      %s16 = sshll.u32 [#allocation4], 4
      %s17 = int_to_ptr.vmem [resolvable:$true] %s16
      %19 = dma.hbm_to_vmem [thread:$0]  %s1, 256, %s17, [#allocation5]
    $region5: #{tpu_custom_call.1} parent=1 // pred_fallthru
      _
    // Predicated region
    $region6: #{tpu_custom_call.1} parent=1 // pred_check
      _
    $region7: #{tpu_custom_call.1} parent=1 // pred_check_branch
      %21 = sbr.rel (0) target = $region9
    $region8: #{tpu_custom_call.1} parent=1 // pred_region
      %22 = dma.done [#allocation5], 256
    $region9: #{tpu_custom_call.1} parent=1 // pred_fallthru
      _
    %s23 = sld [smem:[#allocation3]]
    %s24 = smul.u32 %s23, 2654435769
    %s25 = smul.u32 0, 1024
    %v26 = vlaneseq
    %v27 = vshrl.u32 %v26, 7
    %v28 = vlaneseq
    %v29 = vand.u32 %v28, 127
    %v30 = vadd.s32 %v29, 128
    %v31 = vadd.s32 %v29, 256
    %v32 = vadd.s32 %v29, 384
    %v33 = vshll.u32 %v27, 9
    %v34 = vstv %s25
    %v35 = vadd.s32 %v34, %v33
    %v36 = vadd.s32 %v35, %v29
    %v37 = vadd.s32 %v35, %v30
    %v38 = vadd.s32 %v35, %v31
    %v39 = vadd.s32 %v35, %v32
    %v40 = vstv %s24
    %v41 = vxor.u32 %v36, %v40
    %v42 = vxor.u32 %v37, %v40
    %v43 = vxor.u32 %v38, %v40
    %v44 = vxor.u32 %v39, %v40
    %v45 = vshrl.u32 %v41, 16
    %v46 = vshrl.u32 %v42, 16
    %v47 = vshrl.u32 %v43, 16
    %v48 = vshrl.u32 %v44, 16
    %v49 = vxor.u32 %v41, %v45
    %v50 = vxor.u32 %v42, %v46
    %v51 = vxor.u32 %v43, %v47
    %v52 = vxor.u32 %v44, %v48
    %v53 = vmul.u32 %v49, 2246822507
    %v54 = vmul.u32 %v50, 2246822507
    %v55 = vmul.u32 %v51, 2246822507
    %v56 = vmul.u32 %v52, 2246822507
    %v57 = vshrl.u32 %v53, 13
    %v58 = vshrl.u32 %v54, 13
    %v59 = vshrl.u32 %v55, 13
    %v60 = vshrl.u32 %v56, 13
    %v61 = vxor.u32 %v53, %v57
    %v62 = vxor.u32 %v54, %v58
    %v63 = vxor.u32 %v55, %v59
    %v64 = vxor.u32 %v56, %v60
    %v65 = vmul.u32 %v61, 3266489909
    %v66 = vmul.u32 %v62, 3266489909
    %v67 = vmul.u32 %v63, 3266489909
    %v68 = vmul.u32 %v64, 3266489909
    %v69 = vshrl.u32 %v65, 16
    %v70 = vshrl.u32 %v66, 16
    %v71 = vshrl.u32 %v67, 16
    %v72 = vshrl.u32 %v68, 16
    %v73 = vxor.u32 %v65, %v69
    %v74 = vxor.u32 %v66, %v70
    %v75 = vxor.u32 %v67, %v71
    %v76 = vxor.u32 %v68, %v72
    %v77 = vshrl.u32 %v73, 16
    %v78 = vshrl.u32 %v74, 16
    %v79 = vshrl.u32 %v75, 16
    %v80 = vshrl.u32 %v76, 16
    %v81 = vand.u32 %v73, 65535
    %v82 = vand.u32 %v74, 65535
    %v83 = vand.u32 %v75, 65535
    %v84 = vand.u32 %v76, 65535
    %v85 = vcvt.s32.f32 %v77
    %v86 = vcvt.s32.f32 %v78
    %v87 = vcvt.s32.f32 %v79
    %v88 = vcvt.s32.f32 %v80
    %v89 = vadd.f32 %v85, 1.0
    %v90 = vadd.f32 %v86, 1.0
    %v91 = vadd.f32 %v87, 1.0
    %v92 = vadd.f32 %v88, 1.0
    %v93 = vmul.f32 %v89, 1.5258789e-05
    %v94 = vmul.f32 %v90, 1.5258789e-05
    %v95 = vmul.f32 %v91, 1.5258789e-05
    %v96 = vmul.f32 %v92, 1.5258789e-05
    %v97 = vcvt.s32.f32 %v81
    %v98 = vcvt.s32.f32 %v82
    %v99 = vcvt.s32.f32 %v83
    %v100 = vcvt.s32.f32 %v84
    %v101 = vmul.f32 %v97, 1.5258789e-05
    %v102 = vmul.f32 %v98, 1.5258789e-05
    %v103 = vmul.f32 %v99, 1.5258789e-05
    %v104 = vmul.f32 %v100, 1.5258789e-05
    %v105 = vlog2.pop %v93
    %v106 = vmul.f32 %v105, 0.6931472
    %v107 = vlog2.pop %v94
    %v108 = vmul.f32 %v107, 0.6931472
    %v109 = vlog2.pop %v95
    %v110 = vmul.f32 %v109, 0.6931472
    %v111 = vlog2.pop %v96
    %v112 = vmul.f32 %v111, 0.6931472
    %v113 = vmul.f32 %v106, -2.0
    %v114 = vmul.f32 %v108, -2.0
    %v115 = vmul.f32 %v110, -2.0
    %v116 = vmul.f32 %v112, -2.0
    %v117 = vrsqrt.pop %v113
    %v118 = vmul.f32 %v113, %v117
    %vm119 = vcmp.eq.f32.partialorder %v113, inf
    %v120 = vsel %vm119, %v113, %v118
    %vm121 = vcmp.eq.f32.partialorder %v113, 0.0
    %v122 = vand.u32 %v113, 2147483648
    %v123 = vsel %vm121, %v122, %v120
    %v124 = vrsqrt.pop %v114
    %v125 = vmul.f32 %v114, %v124
    %vm126 = vcmp.eq.f32.partialorder %v114, inf
    %v127 = vsel %vm126, %v114, %v125
    %vm128 = vcmp.eq.f32.partialorder %v114, 0.0
    %v129 = vand.u32 %v114, 2147483648
    %v130 = vsel %vm128, %v129, %v127
    %v131 = vrsqrt.pop %v115
    %v132 = vmul.f32 %v115, %v131
    %vm133 = vcmp.eq.f32.partialorder %v115, inf
    %v134 = vsel %vm133, %v115, %v132
    %vm135 = vcmp.eq.f32.partialorder %v115, 0.0
    %v136 = vand.u32 %v115, 2147483648
    %v137 = vsel %vm135, %v136, %v134
    %v138 = vrsqrt.pop %v116
    %v139 = vmul.f32 %v116, %v138
    %vm140 = vcmp.eq.f32.partialorder %v116, inf
    %v141 = vsel %vm140, %v116, %v139
    %vm142 = vcmp.eq.f32.partialorder %v116, 0.0
    %v143 = vand.u32 %v116, 2147483648
    %v144 = vsel %vm142, %v143, %v141
    %v145 = vmul.f32 %v101, 6.2831855
    %v146 = vmul.f32 %v102, 6.2831855
    %v147 = vmul.f32 %v103, 6.2831855
    %v148 = vmul.f32 %v104, 6.2831855
    %v149 = vand.u32 2147483647, %v145
    %vm150 = vcmp.le.f32.partialorder %v149, 0.7853982
    %vm151 = vcmp.lt.s32.totalorder %v145, 0
    %v152 = vand.u32 %v145, 2139095040
    %v153 = vshrl.u32 %v152, 23
    %v154 = vsub.s32 %v153, 127
    %v155 = vand.u32 2147483647, %v145
    %v156 = vand.u32 %v155, 8388607
    %v157 = vor.u32 %v156, 8388608
    %v158 = vsub.s32 0, %v157
    %v159 = vadd.s32 %v154, 1
    %vm160 = vcmp.gt.s32.totalorder %v159, 0
    %v161 = vsel %vm160, %v159, 0
    %v162 = vshrl.u32 %v161, 5
    %v163 = vand.u32 %v161, 31
    %v164 = vsub.s32 32, %v163
    %v165 = vshrl.u32 683565275, %v164
    %v166 = vshll.u32 683565275, %v163
    %v167 = vshrl.u32 2475754826, %v164
    %v168 = vor.u32 %v166, %v167
    %v169 = vshll.u32 2475754826, %v163
    %v170 = vshrl.u32 2131351028, %v164
    %v171 = vor.u32 %v169, %v170
    %v172 = vshll.u32 2131351028, %v163
    %v173 = vshrl.u32 2102212464, %v164
    %v174 = vor.u32 %v172, %v173
    %v175 = vshll.u32 2102212464, %v163
    %v176 = vshrl.u32 920167782, %v164
    %v177 = vor.u32 %v175, %v176
    %v178 = vshll.u32 920167782, %v163
    %v179 = vshrl.u32 1326507024, %v164
    %v180 = vor.u32 %v178, %v179
    %vm181 = vcmp.lt.s32.totalorder %v162, 1
    %vm182 = vcmp.lt.s32.totalorder %v162, 2
    %vm183 = vcmp.lt.s32.totalorder %v162, 3
    %vm184 = vcmp.lt.s32.totalorder %v162, 4
    %v185 = vsel %vm181, %v165, %v168
    %v186 = vsel %vm184, %v174, 2102212464
    %v187 = vsel %vm183, %v171, %v186
    %v188 = vsel %vm182, %v185, %v187
    %v189 = vsel %vm181, %v168, %v171
    %v190 = vsel %vm184, %v177, 920167782
    %v191 = vsel %vm183, %v174, %v190
    %v192 = vsel %vm182, %v189, %v191
    %v193 = vsel %vm181, %v171, %v174
    %v194 = vsel %vm184, %v180, 1326507024
    %v195 = vsel %vm183, %v177, %v194
    %v196 = vsel %vm182, %v193, %v195
    %v197 = vshll.u32 %v157, 8
    %v198 = vmul.u32.u64.compose %v197, %v196
    %v199 = vextract.low.u32 %v198
    %v200 = vextract.high.u32 %v198
    %v201 = vmul.u32.u64.compose %v197, %v192
    %v202 = vextract.low.u32 %v201
    %v203 = vextract.high.u32 %v201
    %v204 = vmul.u32 %v197, %v188
    %v205 = vadd.s32 %v200, %v202
    %vm206 = vc.u32 %v200, %v202
    %v207 = vadd.s32 %v203, 1
    %v208 = vsel %vm206, %v207, %v203
    %v209 = vadd.s32 %v204, %v208
    %v210 = vadd.s32 %v209, 536870912
    %v211 = vshrl.u32 %v210, 30
    %v212 = vshll.u32 %v211, 30
    %v213 = vsub.s32 %v209, %v212
    %vm214 = vcmp.lt.s32.totalorder %v213, 0
    %v215 = vsub.s32 0, %v213
    %v216 = vsel %vm214, %v215, %v213
    %v217 = vclz %v216
    %v218 = vsub.s32 %v217, 2
    %vm219 = vcmp.gt.s32.totalorder 0, %v218
    %v220 = vsel %vm219, 0, %v218
    %v221 = vsub.s32 32, %v220
    %v222 = vshll.u32 %v213, %v220
    %v223 = vshrl.u32 %v205, %v221
    %v224 = vor.u32 %v222, %v223
    %v225 = vsub.s32 4294967266, %v220
    %v226 = vadd.s32 %v225, 127
    %v227 = vshll.u32 %v226, 23
    %v228 = vor.u32 4788187, %v227
    %v229 = vand.u32 2147483647, %v228
    %v231 = vcvt.s32.f32 %v224
    %v232 = vmul.f32 %v231, %v229
    %v233 = vxor.u32 %v232, 2147483648
    %v234 = vsel %vm151, %v233, %v232
    %v235 = vsub.s32 4, %v211
    %v236 = vsel %vm151, %v235, %v211
    %v237 = vsel %vm150, %v145, %v234
    %v238 = vsel %vm150, 0, %v236
    %v239 = vcosq.f32.pop %v237
    %v240 = vsinq.f32.pop %v237
    %vm241 = vweird.f32 %v145
    %v242 = vand.u32 %v238, 3
    %vm243 = vcmp.lt.s32.totalorder %v242, 2
    %vm244 = vcmp.eq.s32.totalorder %v242, 0
    %v245 = vxor.u32 %v240, 2147483648
    %v246 = vsel %vm244, %v239, %v245
    %vm247 = vcmp.eq.s32.totalorder %v242, 2
    %v248 = vxor.u32 %v239, 2147483648
    %v249 = vsel %vm247, %v248, %v240
    %v250 = vsel %vm243, %v246, %v249
    %v251 = vsel %vm241, nan, %v250
    %v252 = vand.u32 2147483647, %v146
    %vm253 = vcmp.le.f32.partialorder %v252, 0.7853982
    %vm254 = vcmp.lt.s32.totalorder %v146, 0
    %v255 = vand.u32 %v146, 2139095040
    %v256 = vshrl.u32 %v255, 23
    %v257 = vsub.s32 %v256, 127
    %v258 = vand.u32 2147483647, %v146
    %v259 = vand.u32 %v258, 8388607
    %v260 = vor.u32 %v259, 8388608
    %v261 = vsub.s32 0, %v260
    %v262 = vadd.s32 %v257, 1
    %vm263 = vcmp.gt.s32.totalorder %v262, 0
    %v264 = vsel %vm263, %v262, 0
    %v265 = vshrl.u32 %v264, 5
    %v266 = vand.u32 %v264, 31
    %v267 = vsub.s32 32, %v266
    %v268 = vshrl.u32 683565275, %v267
    %v269 = vshll.u32 683565275, %v266
    %v270 = vshrl.u32 2475754826, %v267
    %v271 = vor.u32 %v269, %v270
    %v272 = vshll.u32 2475754826, %v266
    %v273 = vshrl.u32 2131351028, %v267
    %v274 = vor.u32 %v272, %v273
    %v275 = vshll.u32 2131351028, %v266
    %v276 = vshrl.u32 2102212464, %v267
    %v277 = vor.u32 %v275, %v276
    %v278 = vshll.u32 2102212464, %v266
    %v279 = vshrl.u32 920167782, %v267
    %v280 = vor.u32 %v278, %v279
    %v281 = vshll.u32 920167782, %v266
    %v282 = vshrl.u32 1326507024, %v267
    %v283 = vor.u32 %v281, %v282
    %vm284 = vcmp.lt.s32.totalorder %v265, 1
    %vm285 = vcmp.lt.s32.totalorder %v265, 2
    %vm286 = vcmp.lt.s32.totalorder %v265, 3
    %vm287 = vcmp.lt.s32.totalorder %v265, 4
    %v288 = vsel %vm284, %v268, %v271
    %v289 = vsel %vm287, %v277, 2102212464
    %v290 = vsel %vm286, %v274, %v289
    %v291 = vsel %vm285, %v288, %v290
    %v292 = vsel %vm284, %v271, %v274
    %v293 = vsel %vm287, %v280, 920167782
    %v294 = vsel %vm286, %v277, %v293
    %v295 = vsel %vm285, %v292, %v294
    %v296 = vsel %vm284, %v274, %v277
    %v297 = vsel %vm287, %v283, 1326507024
    %v298 = vsel %vm286, %v280, %v297
    %v299 = vsel %vm285, %v296, %v298
    %v300 = vshll.u32 %v260, 8
    %v301 = vmul.u32.u64.compose %v300, %v299
    %v302 = vextract.low.u32 %v301
    %v303 = vextract.high.u32 %v301
    %v304 = vmul.u32.u64.compose %v300, %v295
    %v305 = vextract.low.u32 %v304
    %v306 = vextract.high.u32 %v304
    %v307 = vmul.u32 %v300, %v291
    %v308 = vadd.s32 %v303, %v305
    %vm309 = vc.u32 %v303, %v305
    %v310 = vadd.s32 %v306, 1
    %v311 = vsel %vm309, %v310, %v306
    %v312 = vadd.s32 %v307, %v311
    %v313 = vadd.s32 %v312, 536870912
    %v314 = vshrl.u32 %v313, 30
    %v315 = vshll.u32 %v314, 30
    %v316 = vsub.s32 %v312, %v315
    %vm317 = vcmp.lt.s32.totalorder %v316, 0
    %v318 = vsub.s32 0, %v316
    %v319 = vsel %vm317, %v318, %v316
    %v320 = vclz %v319
    %v321 = vsub.s32 %v320, 2
    %vm322 = vcmp.gt.s32.totalorder 0, %v321
    %v323 = vsel %vm322, 0, %v321
    %v324 = vsub.s32 32, %v323
    %v325 = vshll.u32 %v316, %v323
    %v326 = vshrl.u32 %v308, %v324
    %v327 = vor.u32 %v325, %v326
    %v328 = vsub.s32 4294967266, %v323
    %v329 = vadd.s32 %v328, 127
    %v330 = vshll.u32 %v329, 23
    %v331 = vor.u32 4788187, %v330
    %v332 = vand.u32 2147483647, %v331
    %v334 = vcvt.s32.f32 %v327
    %v335 = vmul.f32 %v334, %v332
    %v336 = vxor.u32 %v335, 2147483648
    %v337 = vsel %vm254, %v336, %v335
    %v338 = vsub.s32 4, %v314
    %v339 = vsel %vm254, %v338, %v314
    %v340 = vsel %vm253, %v146, %v337
    %v341 = vsel %vm253, 0, %v339
    %v342 = vcosq.f32.pop %v340
    %v343 = vsinq.f32.pop %v340
    %vm344 = vweird.f32 %v146
    %v345 = vand.u32 %v341, 3
    %vm346 = vcmp.lt.s32.totalorder %v345, 2
    %vm347 = vcmp.eq.s32.totalorder %v345, 0
    %v348 = vxor.u32 %v343, 2147483648
    %v349 = vsel %vm347, %v342, %v348
    %vm350 = vcmp.eq.s32.totalorder %v345, 2
    %v351 = vxor.u32 %v342, 2147483648
    %v352 = vsel %vm350, %v351, %v343
    %v353 = vsel %vm346, %v349, %v352
    %v354 = vsel %vm344, nan, %v353
    %v355 = vand.u32 2147483647, %v147
    %vm356 = vcmp.le.f32.partialorder %v355, 0.7853982
    %vm357 = vcmp.lt.s32.totalorder %v147, 0
    %v358 = vand.u32 %v147, 2139095040
    %v359 = vshrl.u32 %v358, 23
    %v360 = vsub.s32 %v359, 127
    %v361 = vand.u32 2147483647, %v147
    %v362 = vand.u32 %v361, 8388607
    %v363 = vor.u32 %v362, 8388608
    %v364 = vsub.s32 0, %v363
    %v365 = vadd.s32 %v360, 1
    %vm366 = vcmp.gt.s32.totalorder %v365, 0
    %v367 = vsel %vm366, %v365, 0
    %v368 = vshrl.u32 %v367, 5
    %v369 = vand.u32 %v367, 31
    %v370 = vsub.s32 32, %v369
    %v371 = vshrl.u32 683565275, %v370
    %v372 = vshll.u32 683565275, %v369
    %v373 = vshrl.u32 2475754826, %v370
    %v374 = vor.u32 %v372, %v373
    %v375 = vshll.u32 2475754826, %v369
    %v376 = vshrl.u32 2131351028, %v370
    %v377 = vor.u32 %v375, %v376
    %v378 = vshll.u32 2131351028, %v369
    %v379 = vshrl.u32 2102212464, %v370
    %v380 = vor.u32 %v378, %v379
    %v381 = vshll.u32 2102212464, %v369
    %v382 = vshrl.u32 920167782, %v370
    %v383 = vor.u32 %v381, %v382
    %v384 = vshll.u32 920167782, %v369
    %v385 = vshrl.u32 1326507024, %v370
    %v386 = vor.u32 %v384, %v385
    %vm387 = vcmp.lt.s32.totalorder %v368, 1
    %vm388 = vcmp.lt.s32.totalorder %v368, 2
    %vm389 = vcmp.lt.s32.totalorder %v368, 3
    %vm390 = vcmp.lt.s32.totalorder %v368, 4
    %v391 = vsel %vm387, %v371, %v374
    %v392 = vsel %vm390, %v380, 2102212464
    %v393 = vsel %vm389, %v377, %v392
    %v394 = vsel %vm388, %v391, %v393
    %v395 = vsel %vm387, %v374, %v377
    %v396 = vsel %vm390, %v383, 920167782
    %v397 = vsel %vm389, %v380, %v396
    %v398 = vsel %vm388, %v395, %v397
    %v399 = vsel %vm387, %v377, %v380
    %v400 = vsel %vm390, %v386, 1326507024
    %v401 = vsel %vm389, %v383, %v400
    %v402 = vsel %vm388, %v399, %v401
    %v403 = vshll.u32 %v363, 8
    %v404 = vmul.u32.u64.compose %v403, %v402
    %v405 = vextract.low.u32 %v404
    %v406 = vextract.high.u32 %v404
    %v407 = vmul.u32.u64.compose %v403, %v398
    %v408 = vextract.low.u32 %v407
    %v409 = vextract.high.u32 %v407
    %v410 = vmul.u32 %v403, %v394
    %v411 = vadd.s32 %v406, %v408
    %vm412 = vc.u32 %v406, %v408
    %v413 = vadd.s32 %v409, 1
    %v414 = vsel %vm412, %v413, %v409
    %v415 = vadd.s32 %v410, %v414
    %v416 = vadd.s32 %v415, 536870912
    %v417 = vshrl.u32 %v416, 30
    %v418 = vshll.u32 %v417, 30
    %v419 = vsub.s32 %v415, %v418
    %vm420 = vcmp.lt.s32.totalorder %v419, 0
    %v421 = vsub.s32 0, %v419
    %v422 = vsel %vm420, %v421, %v419
    %v423 = vclz %v422
    %v424 = vsub.s32 %v423, 2
    %vm425 = vcmp.gt.s32.totalorder 0, %v424
    %v426 = vsel %vm425, 0, %v424
    %v427 = vsub.s32 32, %v426
    %v428 = vshll.u32 %v419, %v426
    %v429 = vshrl.u32 %v411, %v427
    %v430 = vor.u32 %v428, %v429
    %v431 = vsub.s32 4294967266, %v426
    %v432 = vadd.s32 %v431, 127
    %v433 = vshll.u32 %v432, 23
    %v434 = vor.u32 4788187, %v433
    %v435 = vand.u32 2147483647, %v434
    %v437 = vcvt.s32.f32 %v430
    %v438 = vmul.f32 %v437, %v435
    %v439 = vxor.u32 %v438, 2147483648
    %v440 = vsel %vm357, %v439, %v438
    %v441 = vsub.s32 4, %v417
    %v442 = vsel %vm357, %v441, %v417
    %v443 = vsel %vm356, %v147, %v440
    %v444 = vsel %vm356, 0, %v442
    %v445 = vcosq.f32.pop %v443
    %v446 = vsinq.f32.pop %v443
    %vm447 = vweird.f32 %v147
    %v448 = vand.u32 %v444, 3
    %vm449 = vcmp.lt.s32.totalorder %v448, 2
    %vm450 = vcmp.eq.s32.totalorder %v448, 0
    %v451 = vxor.u32 %v446, 2147483648
    %v452 = vsel %vm450, %v445, %v451
    %vm453 = vcmp.eq.s32.totalorder %v448, 2
    %v454 = vxor.u32 %v445, 2147483648
    %v455 = vsel %vm453, %v454, %v446
    %v456 = vsel %vm449, %v452, %v455
    %v457 = vsel %vm447, nan, %v456
    %v458 = vand.u32 2147483647, %v148
    %vm459 = vcmp.le.f32.partialorder %v458, 0.7853982
    %vm460 = vcmp.lt.s32.totalorder %v148, 0
    %v461 = vand.u32 %v148, 2139095040
    %v462 = vshrl.u32 %v461, 23
    %v463 = vsub.s32 %v462, 127
    %v464 = vand.u32 2147483647, %v148
    %v465 = vand.u32 %v464, 8388607
    %v466 = vor.u32 %v465, 8388608
    %v467 = vsub.s32 0, %v466
    %v468 = vadd.s32 %v463, 1
    %vm469 = vcmp.gt.s32.totalorder %v468, 0
    %v470 = vsel %vm469, %v468, 0
    %v471 = vshrl.u32 %v470, 5
    %v472 = vand.u32 %v470, 31
    %v473 = vsub.s32 32, %v472
    %v474 = vshrl.u32 683565275, %v473
    %v475 = vshll.u32 683565275, %v472
    %v476 = vshrl.u32 2475754826, %v473
    %v477 = vor.u32 %v475, %v476
    %v478 = vshll.u32 2475754826, %v472
    %v479 = vshrl.u32 2131351028, %v473
    %v480 = vor.u32 %v478, %v479
    %v481 = vshll.u32 2131351028, %v472
    %v482 = vshrl.u32 2102212464, %v473
    %v483 = vor.u32 %v481, %v482
    %v484 = vshll.u32 2102212464, %v472
    %v485 = vshrl.u32 920167782, %v473
    %v486 = vor.u32 %v484, %v485
    %v487 = vshll.u32 920167782, %v472
    %v488 = vshrl.u32 1326507024, %v473
    %v489 = vor.u32 %v487, %v488
    %vm490 = vcmp.lt.s32.totalorder %v471, 1
    %vm491 = vcmp.lt.s32.totalorder %v471, 2
    %vm492 = vcmp.lt.s32.totalorder %v471, 3
    %vm493 = vcmp.lt.s32.totalorder %v471, 4
    %v494 = vsel %vm490, %v474, %v477
    %v495 = vsel %vm493, %v483, 2102212464
    %v496 = vsel %vm492, %v480, %v495
    %v497 = vsel %vm491, %v494, %v496
    %v498 = vsel %vm490, %v477, %v480
    %v499 = vsel %vm493, %v486, 920167782
    %v500 = vsel %vm492, %v483, %v499
    %v501 = vsel %vm491, %v498, %v500
    %v502 = vsel %vm490, %v480, %v483
    %v503 = vsel %vm493, %v489, 1326507024
    %v504 = vsel %vm492, %v486, %v503
    %v505 = vsel %vm491, %v502, %v504
    %v506 = vshll.u32 %v466, 8
    %v507 = vmul.u32.u64.compose %v506, %v505
    %v508 = vextract.low.u32 %v507
    %v509 = vextract.high.u32 %v507
    %v510 = vmul.u32.u64.compose %v506, %v501
    %v511 = vextract.low.u32 %v510
    %v512 = vextract.high.u32 %v510
    %v513 = vmul.u32 %v506, %v497
    %v514 = vadd.s32 %v509, %v511
    %vm515 = vc.u32 %v509, %v511
    %v516 = vadd.s32 %v512, 1
    %v517 = vsel %vm515, %v516, %v512
    %v518 = vadd.s32 %v513, %v517
    %v519 = vadd.s32 %v518, 536870912
    %v520 = vshrl.u32 %v519, 30
    %v521 = vshll.u32 %v520, 30
    %v522 = vsub.s32 %v518, %v521
    %vm523 = vcmp.lt.s32.totalorder %v522, 0
    %v524 = vsub.s32 0, %v522
    %v525 = vsel %vm523, %v524, %v522
    %v526 = vclz %v525
    %v527 = vsub.s32 %v526, 2
    %vm528 = vcmp.gt.s32.totalorder 0, %v527
    %v529 = vsel %vm528, 0, %v527
    %v530 = vsub.s32 32, %v529
    %v531 = vshll.u32 %v522, %v529
    %v532 = vshrl.u32 %v514, %v530
    %v533 = vor.u32 %v531, %v532
    %v534 = vsub.s32 4294967266, %v529
    %v535 = vadd.s32 %v534, 127
    %v536 = vshll.u32 %v535, 23
    %v537 = vor.u32 4788187, %v536
    %v538 = vand.u32 2147483647, %v537
    %v540 = vcvt.s32.f32 %v533
    %v541 = vmul.f32 %v540, %v538
    %v542 = vxor.u32 %v541, 2147483648
    %v543 = vsel %vm460, %v542, %v541
    %v544 = vsub.s32 4, %v520
    %v545 = vsel %vm460, %v544, %v520
    %v546 = vsel %vm459, %v148, %v543
    %v547 = vsel %vm459, 0, %v545
    %v548 = vcosq.f32.pop %v546
    %v549 = vsinq.f32.pop %v546
    %vm550 = vweird.f32 %v148
    %v551 = vand.u32 %v547, 3
    %vm552 = vcmp.lt.s32.totalorder %v551, 2
    %vm553 = vcmp.eq.s32.totalorder %v551, 0
    %v554 = vxor.u32 %v549, 2147483648
    %v555 = vsel %vm553, %v548, %v554
    %vm556 = vcmp.eq.s32.totalorder %v551, 2
    %v557 = vxor.u32 %v548, 2147483648
    %v558 = vsel %vm556, %v557, %v549
    %v559 = vsel %vm552, %v555, %v558
    %v560 = vsel %vm550, nan, %v559
    %v561 = vmul.f32 %v123, %v251
    %v562 = vmul.f32 %v130, %v354
    %v563 = vmul.f32 %v137, %v457
    %v564 = vmul.f32 %v144, %v560
    %v565 = vand.u32 2147483647, %v145
    %vm566 = vcmp.le.f32.partialorder %v565, 0.7853982
    %vm567 = vcmp.lt.s32.totalorder %v145, 0
    %v568 = vand.u32 %v145, 2139095040
    %v569 = vshrl.u32 %v568, 23
    %v570 = vsub.s32 %v569, 127
    %v571 = vand.u32 2147483647, %v145
    %v572 = vand.u32 %v571, 8388607
    %v573 = vor.u32 %v572, 8388608
    %v574 = vsub.s32 0, %v573
    %v575 = vadd.s32 %v570, 1
    %vm576 = vcmp.gt.s32.totalorder %v575, 0
    %v577 = vsel %vm576, %v575, 0
    %v578 = vshrl.u32 %v577, 5
    %v579 = vand.u32 %v577, 31
    %v580 = vsub.s32 32, %v579
    %v581 = vshrl.u32 683565275, %v580
    %v582 = vshll.u32 683565275, %v579
    %v583 = vshrl.u32 2475754826, %v580
    %v584 = vor.u32 %v582, %v583
    %v585 = vshll.u32 2475754826, %v579
    %v586 = vshrl.u32 2131351028, %v580
    %v587 = vor.u32 %v585, %v586
    %v588 = vshll.u32 2131351028, %v579
    %v589 = vshrl.u32 2102212464, %v580
    %v590 = vor.u32 %v588, %v589
    %v591 = vshll.u32 2102212464, %v579
    %v592 = vshrl.u32 920167782, %v580
    %v593 = vor.u32 %v591, %v592
    %v594 = vshll.u32 920167782, %v579
    %v595 = vshrl.u32 1326507024, %v580
    %v596 = vor.u32 %v594, %v595
    %vm597 = vcmp.lt.s32.totalorder %v578, 1
    %vm598 = vcmp.lt.s32.totalorder %v578, 2
    %vm599 = vcmp.lt.s32.totalorder %v578, 3
    %vm600 = vcmp.lt.s32.totalorder %v578, 4
    %v601 = vsel %vm597, %v581, %v584
    %v602 = vsel %vm600, %v590, 2102212464
    %v603 = vsel %vm599, %v587, %v602
    %v604 = vsel %vm598, %v601, %v603
    %v605 = vsel %vm597, %v584, %v587
    %v606 = vsel %vm600, %v593, 920167782
    %v607 = vsel %vm599, %v590, %v606
    %v608 = vsel %vm598, %v605, %v607
    %v609 = vsel %vm597, %v587, %v590
    %v610 = vsel %vm600, %v596, 1326507024
    %v611 = vsel %vm599, %v593, %v610
    %v612 = vsel %vm598, %v609, %v611
    %v613 = vshll.u32 %v573, 8
    %v614 = vmul.u32.u64.compose %v613, %v612
    %v615 = vextract.low.u32 %v614
    %v616 = vextract.high.u32 %v614
    %v617 = vmul.u32.u64.compose %v613, %v608
    %v618 = vextract.low.u32 %v617
    %v619 = vextract.high.u32 %v617
    %v620 = vmul.u32 %v613, %v604
    %v621 = vadd.s32 %v616, %v618
    %vm622 = vc.u32 %v616, %v618
    %v623 = vadd.s32 %v619, 1
    %v624 = vsel %vm622, %v623, %v619
    %v625 = vadd.s32 %v620, %v624
    %v626 = vadd.s32 %v625, 536870912
    %v627 = vshrl.u32 %v626, 30
    %v628 = vshll.u32 %v627, 30
    %v629 = vsub.s32 %v625, %v628
    %vm630 = vcmp.lt.s32.totalorder %v629, 0
    %v631 = vsub.s32 0, %v629
    %v632 = vsel %vm630, %v631, %v629
    %v633 = vclz %v632
    %v634 = vsub.s32 %v633, 2
    %vm635 = vcmp.gt.s32.totalorder 0, %v634
    %v636 = vsel %vm635, 0, %v634
    %v637 = vsub.s32 32, %v636
    %v638 = vshll.u32 %v629, %v636
    %v639 = vshrl.u32 %v621, %v637
    %v640 = vor.u32 %v638, %v639
    %v641 = vsub.s32 4294967266, %v636
    %v642 = vadd.s32 %v641, 127
    %v643 = vshll.u32 %v642, 23
    %v644 = vor.u32 4788187, %v643
    %v645 = vand.u32 2147483647, %v644
    %v647 = vcvt.s32.f32 %v640
    %v648 = vmul.f32 %v647, %v645
    %v649 = vxor.u32 %v648, 2147483648
    %v650 = vsel %vm567, %v649, %v648
    %v651 = vsub.s32 4, %v627
    %v652 = vsel %vm567, %v651, %v627
    %v653 = vsel %vm566, %v145, %v650
    %v654 = vsel %vm566, 0, %v652
    %v655 = vcosq.f32.pop %v653
    %v656 = vsinq.f32.pop %v653
    %vm657 = vweird.f32 %v145
    %v658 = vadd.s32 %v654, 3
    %v659 = vand.u32 %v658, 3
    %vm660 = vcmp.lt.s32.totalorder %v659, 2
    %vm661 = vcmp.eq.s32.totalorder %v659, 0
    %v662 = vxor.u32 %v656, 2147483648
    %v663 = vsel %vm661, %v655, %v662
    %vm664 = vcmp.eq.s32.totalorder %v659, 2
    %v665 = vxor.u32 %v655, 2147483648
    %v666 = vsel %vm664, %v665, %v656
    %v667 = vsel %vm660, %v663, %v666
    %v668 = vsel %vm657, nan, %v667
    %v669 = vand.u32 2147483647, %v146
    %vm670 = vcmp.le.f32.partialorder %v669, 0.7853982
    %vm671 = vcmp.lt.s32.totalorder %v146, 0
    %v672 = vand.u32 %v146, 2139095040
    %v673 = vshrl.u32 %v672, 23
    %v674 = vsub.s32 %v673, 127
    %v675 = vand.u32 2147483647, %v146
    %v676 = vand.u32 %v675, 8388607
    %v677 = vor.u32 %v676, 8388608
    %v678 = vsub.s32 0, %v677
    %v679 = vadd.s32 %v674, 1
    %vm680 = vcmp.gt.s32.totalorder %v679, 0
    %v681 = vsel %vm680, %v679, 0
    %v682 = vshrl.u32 %v681, 5
    %v683 = vand.u32 %v681, 31
    %v684 = vsub.s32 32, %v683
    %v685 = vshrl.u32 683565275, %v684
    %v686 = vshll.u32 683565275, %v683
    %v687 = vshrl.u32 2475754826, %v684
    %v688 = vor.u32 %v686, %v687
    %v689 = vshll.u32 2475754826, %v683
    %v690 = vshrl.u32 2131351028, %v684
    %v691 = vor.u32 %v689, %v690
    %v692 = vshll.u32 2131351028, %v683
    %v693 = vshrl.u32 2102212464, %v684
    %v694 = vor.u32 %v692, %v693
    %v695 = vshll.u32 2102212464, %v683
    %v696 = vshrl.u32 920167782, %v684
    %v697 = vor.u32 %v695, %v696
    %v698 = vshll.u32 920167782, %v683
    %v699 = vshrl.u32 1326507024, %v684
    %v700 = vor.u32 %v698, %v699
    %vm701 = vcmp.lt.s32.totalorder %v682, 1
    %vm702 = vcmp.lt.s32.totalorder %v682, 2
    %vm703 = vcmp.lt.s32.totalorder %v682, 3
    %vm704 = vcmp.lt.s32.totalorder %v682, 4
    %v705 = vsel %vm701, %v685, %v688
    %v706 = vsel %vm704, %v694, 2102212464
    %v707 = vsel %vm703, %v691, %v706
    %v708 = vsel %vm702, %v705, %v707
    %v709 = vsel %vm701, %v688, %v691
    %v710 = vsel %vm704, %v697, 920167782
    %v711 = vsel %vm703, %v694, %v710
    %v712 = vsel %vm702, %v709, %v711
    %v713 = vsel %vm701, %v691, %v694
    %v714 = vsel %vm704, %v700, 1326507024
    %v715 = vsel %vm703, %v697, %v714
    %v716 = vsel %vm702, %v713, %v715
    %v717 = vshll.u32 %v677, 8
    %v718 = vmul.u32.u64.compose %v717, %v716
    %v719 = vextract.low.u32 %v718
    %v720 = vextract.high.u32 %v718
    %v721 = vmul.u32.u64.compose %v717, %v712
    %v722 = vextract.low.u32 %v721
    %v723 = vextract.high.u32 %v721
    %v724 = vmul.u32 %v717, %v708
    %v725 = vadd.s32 %v720, %v722
    %vm726 = vc.u32 %v720, %v722
    %v727 = vadd.s32 %v723, 1
    %v728 = vsel %vm726, %v727, %v723
    %v729 = vadd.s32 %v724, %v728
    %v730 = vadd.s32 %v729, 536870912
    %v731 = vshrl.u32 %v730, 30
    %v732 = vshll.u32 %v731, 30
    %v733 = vsub.s32 %v729, %v732
    %vm734 = vcmp.lt.s32.totalorder %v733, 0
    %v735 = vsub.s32 0, %v733
    %v736 = vsel %vm734, %v735, %v733
    %v737 = vclz %v736
    %v738 = vsub.s32 %v737, 2
    %vm739 = vcmp.gt.s32.totalorder 0, %v738
    %v740 = vsel %vm739, 0, %v738
    %v741 = vsub.s32 32, %v740
    %v742 = vshll.u32 %v733, %v740
    %v743 = vshrl.u32 %v725, %v741
    %v744 = vor.u32 %v742, %v743
    %v745 = vsub.s32 4294967266, %v740
    %v746 = vadd.s32 %v745, 127
    %v747 = vshll.u32 %v746, 23
    %v748 = vor.u32 4788187, %v747
    %v749 = vand.u32 2147483647, %v748
    %v751 = vcvt.s32.f32 %v744
    %v752 = vmul.f32 %v751, %v749
    %v753 = vxor.u32 %v752, 2147483648
    %v754 = vsel %vm671, %v753, %v752
    %v755 = vsub.s32 4, %v731
    %v756 = vsel %vm671, %v755, %v731
    %v757 = vsel %vm670, %v146, %v754
    %v758 = vsel %vm670, 0, %v756
    %v759 = vcosq.f32.pop %v757
    %v760 = vsinq.f32.pop %v757
    %vm761 = vweird.f32 %v146
    %v762 = vadd.s32 %v758, 3
    %v763 = vand.u32 %v762, 3
    %vm764 = vcmp.lt.s32.totalorder %v763, 2
    %vm765 = vcmp.eq.s32.totalorder %v763, 0
    %v766 = vxor.u32 %v760, 2147483648
    %v767 = vsel %vm765, %v759, %v766
    %vm768 = vcmp.eq.s32.totalorder %v763, 2
    %v769 = vxor.u32 %v759, 2147483648
    %v770 = vsel %vm768, %v769, %v760
    %v771 = vsel %vm764, %v767, %v770
    %v772 = vsel %vm761, nan, %v771
    %v773 = vand.u32 2147483647, %v147
    %vm774 = vcmp.le.f32.partialorder %v773, 0.7853982
    %vm775 = vcmp.lt.s32.totalorder %v147, 0
    %v776 = vand.u32 %v147, 2139095040
    %v777 = vshrl.u32 %v776, 23
    %v778 = vsub.s32 %v777, 127
    %v779 = vand.u32 2147483647, %v147
    %v780 = vand.u32 %v779, 8388607
    %v781 = vor.u32 %v780, 8388608
    %v782 = vsub.s32 0, %v781
    %v783 = vadd.s32 %v778, 1
    %vm784 = vcmp.gt.s32.totalorder %v783, 0
    %v785 = vsel %vm784, %v783, 0
    %v786 = vshrl.u32 %v785, 5
    %v787 = vand.u32 %v785, 31
    %v788 = vsub.s32 32, %v787
    %v789 = vshrl.u32 683565275, %v788
    %v790 = vshll.u32 683565275, %v787
    %v791 = vshrl.u32 2475754826, %v788
    %v792 = vor.u32 %v790, %v791
    %v793 = vshll.u32 2475754826, %v787
    %v794 = vshrl.u32 2131351028, %v788
    %v795 = vor.u32 %v793, %v794
    %v796 = vshll.u32 2131351028, %v787
    %v797 = vshrl.u32 2102212464, %v788
    %v798 = vor.u32 %v796, %v797
    %v799 = vshll.u32 2102212464, %v787
    %v800 = vshrl.u32 920167782, %v788
    %v801 = vor.u32 %v799, %v800
    %v802 = vshll.u32 920167782, %v787
    %v803 = vshrl.u32 1326507024, %v788
    %v804 = vor.u32 %v802, %v803
    %vm805 = vcmp.lt.s32.totalorder %v786, 1
    %vm806 = vcmp.lt.s32.totalorder %v786, 2
    %vm807 = vcmp.lt.s32.totalorder %v786, 3
    %vm808 = vcmp.lt.s32.totalorder %v786, 4
    %v809 = vsel %vm805, %v789, %v792
    %v810 = vsel %vm808, %v798, 2102212464
    %v811 = vsel %vm807, %v795, %v810
    %v812 = vsel %vm806, %v809, %v811
    %v813 = vsel %vm805, %v792, %v795
    %v814 = vsel %vm808, %v801, 920167782
    %v815 = vsel %vm807, %v798, %v814
    %v816 = vsel %vm806, %v813, %v815
    %v817 = vsel %vm805, %v795, %v798
    %v818 = vsel %vm808, %v804, 1326507024
    %v819 = vsel %vm807, %v801, %v818
    %v820 = vsel %vm806, %v817, %v819
    %v821 = vshll.u32 %v781, 8
    %v822 = vmul.u32.u64.compose %v821, %v820
    %v823 = vextract.low.u32 %v822
    %v824 = vextract.high.u32 %v822
    %v825 = vmul.u32.u64.compose %v821, %v816
    %v826 = vextract.low.u32 %v825
    %v827 = vextract.high.u32 %v825
    %v828 = vmul.u32 %v821, %v812
    %v829 = vadd.s32 %v824, %v826
    %vm830 = vc.u32 %v824, %v826
    %v831 = vadd.s32 %v827, 1
    %v832 = vsel %vm830, %v831, %v827
    %v833 = vadd.s32 %v828, %v832
    %v834 = vadd.s32 %v833, 536870912
    %v835 = vshrl.u32 %v834, 30
    %v836 = vshll.u32 %v835, 30
    %v837 = vsub.s32 %v833, %v836
    %vm838 = vcmp.lt.s32.totalorder %v837, 0
    %v839 = vsub.s32 0, %v837
    %v840 = vsel %vm838, %v839, %v837
    %v841 = vclz %v840
    %v842 = vsub.s32 %v841, 2
    %vm843 = vcmp.gt.s32.totalorder 0, %v842
    %v844 = vsel %vm843, 0, %v842
    %v845 = vsub.s32 32, %v844
    %v846 = vshll.u32 %v837, %v844
    %v847 = vshrl.u32 %v829, %v845
    %v848 = vor.u32 %v846, %v847
    %v849 = vsub.s32 4294967266, %v844
    %v850 = vadd.s32 %v849, 127
    %v851 = vshll.u32 %v850, 23
    %v852 = vor.u32 4788187, %v851
    %v853 = vand.u32 2147483647, %v852
    %v855 = vcvt.s32.f32 %v848
    %v856 = vmul.f32 %v855, %v853
    %v857 = vxor.u32 %v856, 2147483648
    %v858 = vsel %vm775, %v857, %v856
    %v859 = vsub.s32 4, %v835
    %v860 = vsel %vm775, %v859, %v835
    %v861 = vsel %vm774, %v147, %v858
    %v862 = vsel %vm774, 0, %v860
    %v863 = vcosq.f32.pop %v861
    %v864 = vsinq.f32.pop %v861
    %vm865 = vweird.f32 %v147
    %v866 = vadd.s32 %v862, 3
    %v867 = vand.u32 %v866, 3
    %vm868 = vcmp.lt.s32.totalorder %v867, 2
    %vm869 = vcmp.eq.s32.totalorder %v867, 0
    %v870 = vxor.u32 %v864, 2147483648
    %v871 = vsel %vm869, %v863, %v870
    %vm872 = vcmp.eq.s32.totalorder %v867, 2
    %v873 = vxor.u32 %v863, 2147483648
    %v874 = vsel %vm872, %v873, %v864
    %v875 = vsel %vm868, %v871, %v874
    %v876 = vsel %vm865, nan, %v875
    %v877 = vand.u32 2147483647, %v148
    %vm878 = vcmp.le.f32.partialorder %v877, 0.7853982
    %vm879 = vcmp.lt.s32.totalorder %v148, 0
    %v880 = vand.u32 %v148, 2139095040
    %v881 = vshrl.u32 %v880, 23
    %v882 = vsub.s32 %v881, 127
    %v883 = vand.u32 2147483647, %v148
    %v884 = vand.u32 %v883, 8388607
    %v885 = vor.u32 %v884, 8388608
    %v886 = vsub.s32 0, %v885
    %v887 = vadd.s32 %v882, 1
    %vm888 = vcmp.gt.s32.totalorder %v887, 0
    %v889 = vsel %vm888, %v887, 0
    %v890 = vshrl.u32 %v889, 5
    %v891 = vand.u32 %v889, 31
    %v892 = vsub.s32 32, %v891
    %v893 = vshrl.u32 683565275, %v892
    %v894 = vshll.u32 683565275, %v891
    %v895 = vshrl.u32 2475754826, %v892
    %v896 = vor.u32 %v894, %v895
    %v897 = vshll.u32 2475754826, %v891
    %v898 = vshrl.u32 2131351028, %v892
    %v899 = vor.u32 %v897, %v898
    %v900 = vshll.u32 2131351028, %v891
    %v901 = vshrl.u32 2102212464, %v892
    %v902 = vor.u32 %v900, %v901
    %v903 = vshll.u32 2102212464, %v891
    %v904 = vshrl.u32 920167782, %v892
    %v905 = vor.u32 %v903, %v904
    %v906 = vshll.u32 920167782, %v891
    %v907 = vshrl.u32 1326507024, %v892
    %v908 = vor.u32 %v906, %v907
    %vm909 = vcmp.lt.s32.totalorder %v890, 1
    %vm910 = vcmp.lt.s32.totalorder %v890, 2
    %vm911 = vcmp.lt.s32.totalorder %v890, 3
    %vm912 = vcmp.lt.s32.totalorder %v890, 4
    %v913 = vsel %vm909, %v893, %v896
    %v914 = vsel %vm912, %v902, 2102212464
    %v915 = vsel %vm911, %v899, %v914
    %v916 = vsel %vm910, %v913, %v915
    %v917 = vsel %vm909, %v896, %v899
    %v918 = vsel %vm912, %v905, 920167782
    %v919 = vsel %vm911, %v902, %v918
    %v920 = vsel %vm910, %v917, %v919
    %v921 = vsel %vm909, %v899, %v902
    %v922 = vsel %vm912, %v908, 1326507024
    %v923 = vsel %vm911, %v905, %v922
    %v924 = vsel %vm910, %v921, %v923
    %v925 = vshll.u32 %v885, 8
    %v926 = vmul.u32.u64.compose %v925, %v924
    %v927 = vextract.low.u32 %v926
    %v928 = vextract.high.u32 %v926
    %v929 = vmul.u32.u64.compose %v925, %v920
    %v930 = vextract.low.u32 %v929
    %v931 = vextract.high.u32 %v929
    %v932 = vmul.u32 %v925, %v916
    %v933 = vadd.s32 %v928, %v930
    %vm934 = vc.u32 %v928, %v930
    %v935 = vadd.s32 %v931, 1
    %v936 = vsel %vm934, %v935, %v931
    %v937 = vadd.s32 %v932, %v936
    %v938 = vadd.s32 %v937, 536870912
    %v939 = vshrl.u32 %v938, 30
    %v940 = vshll.u32 %v939, 30
    %v941 = vsub.s32 %v937, %v940
    %vm942 = vcmp.lt.s32.totalorder %v941, 0
    %v943 = vsub.s32 0, %v941
    %v944 = vsel %vm942, %v943, %v941
    %v945 = vclz %v944
    %v946 = vsub.s32 %v945, 2
    %vm947 = vcmp.gt.s32.totalorder 0, %v946
    %v948 = vsel %vm947, 0, %v946
    %v949 = vsub.s32 32, %v948
    %v950 = vshll.u32 %v941, %v948
    %v951 = vshrl.u32 %v933, %v949
    %v952 = vor.u32 %v950, %v951
    %v953 = vsub.s32 4294967266, %v948
    %v954 = vadd.s32 %v953, 127
    %v955 = vshll.u32 %v954, 23
    %v956 = vor.u32 4788187, %v955
    %v957 = vand.u32 2147483647, %v956
    %v959 = vcvt.s32.f32 %v952
    %v960 = vmul.f32 %v959, %v957
    %v961 = vxor.u32 %v960, 2147483648
    %v962 = vsel %vm879, %v961, %v960
    %v963 = vsub.s32 4, %v939
    %v964 = vsel %vm879, %v963, %v939
    %v965 = vsel %vm878, %v148, %v962
    %v966 = vsel %vm878, 0, %v964
    %v967 = vcosq.f32.pop %v965
    %v968 = vsinq.f32.pop %v965
    %vm969 = vweird.f32 %v148
    %v970 = vadd.s32 %v966, 3
    %v971 = vand.u32 %v970, 3
    %vm972 = vcmp.lt.s32.totalorder %v971, 2
    %vm973 = vcmp.eq.s32.totalorder %v971, 0
    %v974 = vxor.u32 %v968, 2147483648
    %v975 = vsel %vm973, %v967, %v974
    %vm976 = vcmp.eq.s32.totalorder %v971, 2
    %v977 = vxor.u32 %v967, 2147483648
    %v978 = vsel %vm976, %v977, %v968
    %v979 = vsel %vm972, %v975, %v978
    %v980 = vsel %vm969, nan, %v979
    %v981 = vmul.f32 %v123, %v668
    %v982 = vmul.f32 %v130, %v772
    %v983 = vmul.f32 %v137, %v876
    %v984 = vmul.f32 %v144, %v980
    %v985 = vld [vmem:[#allocation4] sm:$0xff]
    %v986 = vmax.f32 %v985, 0.01
    %v987 = vld [vmem:[#allocation4 + $0x8] sm:$0xff]
    %v988 = vmax.f32 %v987, 0.01
    %v989 = vmul.f32 %v561, 0.3
    %v990 = vmul.f32 %v562, 0.3
    %v991 = vmul.f32 %v563, 0.3
    %v992 = vmul.f32 %v564, 0.3
    %v993 = vadd.f32 %v989, 1.0
    %v994 = vadd.f32 %v990, 1.0
    %v995 = vadd.f32 %v991, 1.0
    %v996 = vadd.f32 %v992, 1.0
    %v1001 = vcombine.low %v993, %v994
    %v1002 = vcombine.low %v995, %v996
    %v1004 = vunpack.c.l.s4 1983009808
    %v1005 = vunpack.c.0.s8 %v1004
    %v1006 = vlaneseq
    %v1007 = vshrl.u32 %v1006, 7
    %v1008 = vsub.s32 %v1005, %v1007
    %v1009 = vrot.slane %v1001, %v1008
    %v1011 = vunpack.c.l.s4 1983009808
    %v1012 = vunpack.c.0.s8 %v1011
    %v1013 = vlaneseq
    %v1014 = vshrl.u32 %v1013, 7
    %v1015 = vsub.s32 %v1012, %v1014
    %v1016 = vrot.slane %v1002, %v1015
    %v1017 = vcombine.low %v1009, %v1016
    %v1019 = vmul.f32 %v986, %v1017
    %v1020 = vmax.f32 %v1019, 0.0
    %v1021 = vmin.f32 %v1020, 1.0
    %1022 = vst [vmem:[#allocation7] sm:$0xff] %v1021
    %v1023 = vmul.f32 %v981, 0.3
    %v1024 = vmul.f32 %v982, 0.3
    %v1025 = vmul.f32 %v983, 0.3
    %v1026 = vmul.f32 %v984, 0.3
    %v1027 = vadd.f32 %v1023, 1.0
    %v1028 = vadd.f32 %v1024, 1.0
    %v1029 = vadd.f32 %v1025, 1.0
    %v1030 = vadd.f32 %v1026, 1.0
    %v1035 = vcombine.low %v1027, %v1028
    %v1036 = vcombine.low %v1029, %v1030
    %v1038 = vunpack.c.l.s4 1983009808
    %v1039 = vunpack.c.0.s8 %v1038
    %v1040 = vlaneseq
    %v1041 = vshrl.u32 %v1040, 7
    %v1042 = vsub.s32 %v1039, %v1041
    %v1043 = vrot.slane %v1035, %v1042
    %v1045 = vunpack.c.l.s4 1983009808
    %v1046 = vunpack.c.0.s8 %v1045
    %v1047 = vlaneseq
    %v1048 = vshrl.u32 %v1047, 7
    %v1049 = vsub.s32 %v1046, %v1048
    %v1050 = vrot.slane %v1036, %v1049
    %v1051 = vcombine.low %v1043, %v1050
    %v1053 = vmul.f32 %v988, %v1051
    %v1054 = vmax.f32 %v1053, 0.0
    %v1055 = vmin.f32 %v1054, 1.0
    %1056 = vst [vmem:[#allocation7 + $0x8] sm:$0xff] %v1055
    // Predicated region
    $region10: #{tpu_custom_call.1} parent=1 // pred_check
      _
    $region11: #{tpu_custom_call.1} parent=1 // pred_check_branch
      %1058 = sbr.rel (0) target = $region13
    $region12: #{tpu_custom_call.1} parent=1 // pred_region
      %s1060 = ssub.s32 256, 256
      %1061 = vsyncadd [#allocation6], %s1060
      %s1063 = sshll.u32 [#allocation7], 4
      %s1064 = int_to_ptr.vmem [resolvable:$true] %s1063
      %1066 = dma.vmem_to_hbm [thread:$0]  %s1064, 256, %s2, [#allocation6]
    $region13: #{tpu_custom_call.1} parent=1 // pred_fallthru
      _
    // Predicated region
    $region14: #{tpu_custom_call.1} parent=1 // pred_check
      _
    $region15: #{tpu_custom_call.1} parent=1 // pred_check_branch
      %1068 = sbr.rel (0) target = $region17
    $region16: #{tpu_custom_call.1} parent=1 // pred_region
      %1069 = dma.done [#allocation6], 256
    $region17: #{tpu_custom_call.1} parent=1 // pred_fallthru
      _
    %1070 = vsyncpa [#allocation5], 1
    %1071 = vsyncpa [#allocation6], 1

</llo_original>
